<compile_context>
chip_gen: v7x
topology: tpu7x:2x2x1
jax: 0.10.0
libtpu: 0.0.40
codegen_flags: <defaults>
</compile_context>

<pallas_src>
import functools
import numpy as np
import jax
import jax.numpy as jnp
from jax.experimental import pallas as pl
from jax.experimental.pallas import tpu as pltpu

MIN_NORM = 1e-15
BALL_EPS_F32 = 4e-3  # hgcn PoincareBall eps for float32


def _round_up(a, b):
    return (a + b - 1) // b * b


def _ceil_div(a, b):
    return -(-a // b)


def _artanh(x):
    # matches hgcn Artanh: clamp then 0.5*(log1p(x) - log1p(-x))
    x = jnp.clip(x, -1.0 + 1e-15, 1.0 - 1e-15)
    return 0.5 * (jnp.log1p(x) - jnp.log1p(-x))


def _proj_jax(x, sqrt_c):
    # project onto the Poincare ball of curvature c (wrapper / reference only)
    norm = jnp.maximum(jnp.linalg.norm(x, axis=-1, keepdims=True), MIN_NORM)
    maxnorm = (1.0 - BALL_EPS_F32) / sqrt_c
    return jnp.where(norm > maxnorm, x / norm * maxnorm, x)


def _vmem_cap_bytes():
    """Generation-aware VMEM cap (leave ~1/8 headroom for compiler temporaries)."""
    try:
        cap = int(pltpu.get_tpu_info().vmem_capacity_bytes)
    except Exception:
        cap = 64 * 1024 * 1024  # conservative: v7x per-TC VMEM
    return max(16 * 1024 * 1024, cap * 7 // 8)


# --------------------------------------------------------------------------------------
# Shared epilogue: mobius_matvec rescale + proj + mobius_add(hb) + proj,
# without ever materializing `res`.  All divides / selects are on (TM,1) row vectors;
# full-width (TM,OUT) work is: 2 mul+reduce (mx*mx, mx*hb), 1 mul+reduce (num*num),
# 2 mul + 1 add (num), 1 mul (final scale).
# --------------------------------------------------------------------------------------
def _epilogue(x2, mx, hb, c, o_ref):
    sqrt_c = c ** 0.5
    maxnorm = (1.0 - BALL_EPS_F32) / sqrt_c

    x_norm = jnp.maximum(jnp.sqrt(x2), MIN_NORM)                       # (TM,1)
    mx2 = jnp.sum(mx * mx, axis=-1, keepdims=True)                     # (TM,1)
    mx_norm = jnp.maximum(jnp.sqrt(mx2), MIN_NORM)
    zero_row = mx2 <= 0.0                                              # == all(mx == 0)

    tanh_t = jnp.tanh((mx_norm / x_norm) * _artanh(sqrt_c * x_norm))   # (TM,1), EUP
    mv_scale = tanh_t / (mx_norm * sqrt_c)                             # res = mv_scale * mx
    # ||res|| == tanh_t / sqrt_c analytically -> project without another XLU reduction.
    mv_norm = jnp.maximum(tanh_t / sqrt_c, MIN_NORM)
    proj_scale = jnp.where(mv_norm > maxnorm, maxnorm / mv_norm, 1.0)
    row_scale = jnp.where(zero_row, 0.0, mv_scale * proj_scale)        # (TM,1)

    # ---- mobius_add(row_scale * mx, hb) without materializing res ----
    mx_hb = jnp.sum(mx * hb, axis=-1, keepdims=True)                   # (TM,1)
    y2 = jnp.sum(hb * hb, axis=-1, keepdims=True)                      # (1,1) tiny
    xy = row_scale * mx_hb
    r2 = (row_scale * row_scale) * mx2
    coef = 1.0 + 2.0 * c * xy
    a = (coef + c * y2) * row_scale                                    # (TM,1)
    b = 1.0 - c * r2                                                   # (TM,1)
    num = a * mx + b * hb                                              # (TM,OUT)
    denom = jnp.maximum(coef + (c * c) * r2 * y2, MIN_NORM)
    recip = pl.reciprocal(denom, approx=False)                         # (TM,1)

    # ---- final proj folded into one per-row scale ----
    n2 = jnp.sum(num * num, axis=-1, keepdims=True)                    # (TM,1)
    o_norm = jnp.maximum(jnp.sqrt(n2) * recip, MIN_NORM)
    final_scale = recip * jnp.where(o_norm > maxnorm, maxnorm / o_norm, 1.0)
    o_ref[...] = (num * final_scale).astype(o_ref.dtype)


# --------------------------------------------------------------------------------------
# Kernels
# --------------------------------------------------------------------------------------
def _hyp_linear_resident_kernel(x_ref, wt_ref, hb_ref, o_ref, *, c, mxu_dtype):
    """Weight stays resident in VMEM; grid is row tiles only."""
    xf = x_ref[...].astype(jnp.float32)                 # (TM, Kp)
    hb = hb_ref[...].astype(jnp.float32)                # (1, OUTp)
    if mxu_dtype is not None:
        lhs = xf.astype(mxu_dtype)
        rhs = wt_ref[...].astype(mxu_dtype)
    else:
        lhs = xf
        rhs = wt_ref[...].astype(jnp.float32)
    mx = jnp.dot(lhs, rhs, preferred_element_type=jnp.float32)   # (TM, OUTp)
    x2 = jnp.sum(xf * xf, axis=-1, keepdims=True)                # (TM,1)
    _epilogue(x2, mx, hb, c, o_ref)


def _hyp_linear_ktiled_kernel(x_ref, wt_ref, hb_ref, o_ref, acc_ref, x2_ref, *,
                              c, mxu_dtype):
    """Weight streamed in (tk, OUTp) blocks along an 'arbitrary' K axis; f32 accumulator."""
    kidx = pl.program_id(1)

    @pl.when(kidx == 0)
    def _():
        acc_ref[...] = jnp.zeros_like(acc_ref)
        x2_ref[...] = jnp.zeros_like(x2_ref)

    xf = x_ref[...].astype(jnp.float32)                  # (TM, tk)
    if mxu_dtype is not None:
        lhs = xf.astype(mxu_dtype)
        rhs = wt_ref[...].astype(mxu_dtype)
    else:
        lhs = xf
        rhs = wt_ref[...].astype(jnp.float32)
    acc_ref[...] += jnp.dot(lhs, rhs, preferred_element_type=jnp.float32)
    x2_ref[...] += jnp.sum(xf * xf, axis=-1, keepdims=True)

    @pl.when(kidx == pl.num_programs(1) - 1)
    def _():
        _epilogue(x2_ref[...], acc_ref[...], hb_ref[...].astype(jnp.float32), c, o_ref)


# --------------------------------------------------------------------------------------
# One-time parameter preparation (at init / after each weight update, NOT per call)
# --------------------------------------------------------------------------------------
def prepare_hyp_linear_params(weight, bias, c, *, param_dtype=jnp.bfloat16):
    """Transpose the (out,in) weight to (in,out); zero-pad in->128 multiple (lane-dense x
    tiles / full MXU contraction) and out->128 multiple (lane-dense stores); precompute the
    hyperbolic bias proj(expmap0(proj_tan0(b))); cast the weight to bf16 by default (native
    MXU rate, half the weight DMA bytes).  Pass param_dtype=None to keep an f32 weight."""
    out_f, in_f = weight.shape
    out_pad = _round_up(max(out_f, 1), 128)
    k_pad = _round_up(max(in_f, 1), 128)
    sqrt_c = float(c) ** 0.5

    wt = jnp.pad(weight.T.astype(jnp.float32),
                 ((0, k_pad - in_f), (0, out_pad - out_f)))
    if param_dtype is not None:
        wt = wt.astype(param_dtype)

    b = jnp.pad(bias.astype(jnp.float32), (0, out_pad - out_f)).reshape(1, out_pad)
    b_norm = jnp.maximum(jnp.linalg.norm(b, axis=-1, keepdims=True), MIN_NORM)
    hb = jnp.tanh(sqrt_c * b_norm) * b / (sqrt_c * b_norm)    # expmap0(proj_tan0(b))
    hb = _proj_jax(hb, sqrt_c)                                # (1, out_pad), f32
    return wt, hb, out_f


# --------------------------------------------------------------------------------------
# Wrapper
# --------------------------------------------------------------------------------------
def hyp_linear(x, weight_t, hyp_bias, c, out_features=None, *, tile_m=256,
               mxu_dtype=jnp.bfloat16, k_tile=None, out_dtype=jnp.float32):
    """x: (N, in) f32; weight_t: (in_pad, out_pad) from prepare_hyp_linear_params;
    hyp_bias: (1, out_pad) f32; returns (N, out_features)."""
    n, k_in = x.shape
    k_pad, out_pad = weight_t.shape
    assert k_pad >= k_in, "weight_t must be (in_pad >= in_features, out_pad)"
    if out_features is None:
        out_features = out_pad
    c = float(c)

    # --- balanced row tiles: no huge pad-row waste, >=2 grid steps when there is enough
    # work so v7x's two TensorCores both get a 'parallel' slice (cheap on 1-TC chips). ---
    n_steps = max(1, _ceil_div(n, int(tile_m)))
    if n >= 16:
        n_steps = max(n_steps, 2)
    tm = max(8, _round_up(_ceil_div(n, n_steps), 8))
    n_pad = _round_up(n, tm)
    grid_m = n_pad // tm

    # single HBM pad (rows for the grid, cols to the 128-padded K; zeros don't change
    # the matmul or x_norm).
    row_pad, col_pad = n_pad - n, k_pad - k_in
    if row_pad or col_pad:
        x = jnp.pad(x, ((0, row_pad), (0, col_pad)))

    # --- VMEM budgeting (includes the in-kernel f32 (tm,out_pad) temporaries) ---
    w_item = jnp.dtype(weight_t.dtype).itemsize
    x_item = jnp.dtype(x.dtype).itemsize
    cap = _vmem_cap_bytes()
    interm = 4 * tm * out_pad * 4 + tm * k_pad * 4      # mx/num/out temporaries + xf copy

    resident_need = (2 * tm * k_pad * x_item            # double-buffered x tiles
                     + 1 * k_pad * out_pad * w_item     # single-buffered resident weight
                     + 1 * out_pad * 4                  # single-buffered bias
                     + 2 * tm * out_pad * 4             # double-buffered output tiles
                     + interm)

    use_ktile = (k_tile is not None) or (resident_need > cap // 2)

    if use_ktile:
        tk = int(k_tile) if k_tile is not None else 512
        tk = min(max(128, _round_up(min(tk, k_pad), 128)), k_pad)
        while k_pad % tk != 0:          # tk must evenly divide the padded K
            tk -= 128
        need = (2 * tm * tk * x_item
                + 2 * tk * out_pad * w_item
                + 1 * out_pad * 4
                + 2 * tm * out_pad * 4
                + tm * out_pad * 4 + tm * 4              # acc + x2 scratch
                + interm)
        dims = ("parallel", "arbitrary")
    else:
        tk = k_pad
        need = resident_need
        dims = ("parallel",)

    compiler_kwargs = dict(dimension_semantics=dims)
    if need > 12 * 1024 * 1024:
        compiler_kwargs["vmem_limit_bytes"] = min(int(need * 1.3) + (2 << 20), cap)

    def _run(single_buffer_const):
        # Constant-index-map inputs only need one buffer; Buffered(1) halves their VMEM.
        const_kw = {"pipeline_mode": pl.Buffered(1)} if single_buffer_const else {}
        if use_ktile:
            grid_spec = pltpu.PrefetchScalarGridSpec(
                num_scalar_prefetch=0,
                grid=(grid_m, k_pad // tk),
                in_specs=[
                    pl.BlockSpec((tm, tk), lambda i, j: (i, j)),           # x tile
                    pl.BlockSpec((tk, out_pad), lambda i, j: (j, 0)),      # streamed weight
                    pl.BlockSpec((1, out_pad), lambda i, j: (0, 0), **const_kw),
                ],
                out_specs=pl.BlockSpec((tm, out_pad), lambda i, j: (i, 0)),
                scratch_shapes=[pltpu.VMEM((tm, out_pad), jnp.float32),
                                pltpu.VMEM((tm, 1), jnp.float32)],
            )
            kernel = functools.partial(_hyp_linear_ktiled_kernel, c=c, mxu_dtype=mxu_dtype)
        else:
            grid_spec = pltpu.PrefetchScalarGridSpec(
                num_scalar_prefetch=0,
                grid=(grid_m,),
                in_specs=[
                    pl.BlockSpec((tm, k_pad), lambda i: (i, 0)),                    # x tile
                    pl.BlockSpec((k_pad, out_pad), lambda i: (0, 0), **const_kw),   # weight
                    pl.BlockSpec((1, out_pad), lambda i: (0, 0), **const_kw),       # bias
                ],
                out_specs=pl.BlockSpec((tm, out_pad), lambda i: (i, 0)),
            )
            kernel = functools.partial(_hyp_linear_resident_kernel, c=c, mxu_dtype=mxu_dtype)
        return pl.pallas_call(
            kernel,
            out_shape=jax.ShapeDtypeStruct((n_pad, out_pad), out_dtype),
            grid_spec=grid_spec,
            compiler_params=pltpu.CompilerParams(**compiler_kwargs),
        )(x, weight_t, hyp_bias)

    try:
        out = _run(True)
    except Exception:
        # Fallback if this jax build rejects pl.Buffered(1): default double buffering.
        out = _run(False)

    # TODO(synk): consumers that tolerate zero-padded columns / rows can take `out`
    # directly and skip this HBM->HBM slice copy.
    if n_pad == n and out_features == out_pad:
        return out
    return out[:n, :out_features]


# --------------------------------------------------------------------------------------
# Pure-JAX reference (mirrors PyTorch / hgcn PoincareBall math exactly)
# --------------------------------------------------------------------------------------
def hyp_linear_ref(x, weight, bias, c):
    sqrt_c = c ** 0.5
    x_norm = jnp.maximum(jnp.linalg.norm(x, axis=-1, keepdims=True), MIN_NORM)
    mx = x @ weight.T
    mx_norm = jnp.maximum(jnp.linalg.norm(mx, axis=-1, keepdims=True), MIN_NORM)
    res_c = jnp.tanh(mx_norm / x_norm * _artanh(sqrt_c * x_norm)) * mx / (mx_norm * sqrt_c)
    mv = jnp.where(jnp.all(mx == 0.0, axis=-1, keepdims=True), 0.0, res_c)
    res = _proj_jax(mv, sqrt_c)
    b = bias.reshape(1, -1)
    b_norm = jnp.maximum(jnp.linalg.norm(b, axis=-1, keepdims=True), MIN_NORM)
    hb = _proj_jax(jnp.tanh(sqrt_c * b_norm) * b / (sqrt_c * b_norm), sqrt_c)
    x2 = jnp.sum(res * res, -1, keepdims=True)
    y2 = jnp.sum(hb * hb, -1, keepdims=True)
    xy = jnp.sum(res * hb, -1, keepdims=True)
    num = (1 + 2 * c * xy + c * y2) * res + (1 - c * x2) * hb
    den = jnp.maximum(1 + 2 * c * xy + c * c * x2 * y2, MIN_NORM)
    return _proj_jax(num / den, sqrt_c)


if __name__ == "__main__":
    key = jax.random.PRNGKey(0)
    k1, k2, k3, k4, k5, k6, k7, k8 = jax.random.split(key, 8)

    # ---------- Check A: small layer, f32 MXU path, zero bias, tight tolerance ----------
    N, IN_F, OUT_F, C = 8, 32, 32, 1.0
    bound = 1.0 / np.sqrt(IN_F)
    weight = jax.random.uniform(k1, (OUT_F, IN_F), jnp.float32, -bound, bound)
    bias = jnp.zeros((OUT_F,), jnp.float32)             # init.constant_(bias, 0)
    x = 0.05 * jax.random.normal(k2, (N, IN_F), jnp.float32)

    wt, hb, out_f = prepare_hyp_linear_params(weight, bias, C, param_dtype=None)
    out = jax.block_until_ready(hyp_linear(x, wt, hb, C, out_f, mxu_dtype=None))
    ref = hyp_linear_ref(x, weight, bias, C)
    np.testing.assert_allclose(np.asarray(out), np.asarray(ref), rtol=1e-4, atol=1e-5)

    # ---------- Check B: bigger layer, bf16 MXU path (default), nonzero bias ----------
    N2, IN2, OUT2, C2 = 300, 96, 160, 1.0
    bound2 = 1.0 / np.sqrt(IN2)
    weight2 = jax.random.uniform(k3, (OUT2, IN2), jnp.float32, -bound2, bound2)
    bias2 = 0.02 * jax.random.normal(k4, (OUT2,), jnp.float32)
    x_b = 0.05 * jax.random.normal(k5, (N2, IN2), jnp.float32)

    wt2, hb2, out_f2 = prepare_hyp_linear_params(weight2, bias2, C2)   # bf16 weight
    out2 = jax.block_until_ready(hyp_linear(x_b, wt2, hb2, C2, out_f2, tile_m=256))
    ref2 = hyp_linear_ref(x_b, weight2, bias2, C2)
    np.testing.assert_allclose(np.asarray(out2), np.asarray(ref2), rtol=5e-2, atol=2e-3)

    # ---------- Check C: K-tiled accumulator path (forced), f32 operands ----------
    N3, IN3, OUT3, C3 = 64, 300, 200, 0.7
    bound3 = 1.0 / np.sqrt(IN3)
    weight3 = jax.random.uniform(k6, (OUT3, IN3), jnp.float32, -bound3, bound3)
    bias3 = 0.02 * jax.random.normal(k7, (OUT3,), jnp.float32)
    x_c = 0.05 * jax.random.normal(k8, (N3, IN3), jnp.float32)

    wt3, hb3, out_f3 = prepare_hyp_linear_params(weight3, bias3, C3, param_dtype=None)
    out3 = jax.block_until_ready(
        hyp_linear(x_c, wt3, hb3, C3, out_f3, mxu_dtype=None, k_tile=128))
    ref3 = hyp_linear_ref(x_c, weight3, bias3, C3)
    np.testing.assert_allclose(np.asarray(out3), np.asarray(ref3), rtol=1e-4, atol=1e-5)

    print("KERNEL_OK")
</pallas_src>

<mosaic_0001>
module attributes {stable_mosaic.version = 11 : i64} {
  func.func @_hyp_linear_resident_kernel(%arg0: i32, %arg1: memref<8x128xf32, #tpu.memory_space<vmem>>, %arg2: memref<128x128xf32, #tpu.memory_space<vmem>>, %arg3: memref<1x128xf32, #tpu.memory_space<vmem>>, %arg4: memref<8x128xf32, #tpu.memory_space<vmem>>) attributes {dimension_semantics = [#tpu.dimension_semantics<parallel>], iteration_bounds = array<i64: 1>, scalar_prefetch = 0 : i64, scratch_operands = 0 : i64, tpu.core_type = #tpu.core_type<tc>, window_params = [{transform_indices = @transform_0, window_bounds = array<i64: 8, 128>}, {pipeline_mode = #tpu.pipeline_mode<synchronous>, transform_indices = @transform_1, window_bounds = array<i64: 128, 128>}, {pipeline_mode = #tpu.pipeline_mode<synchronous>, transform_indices = @transform_2, window_bounds = array<i64: 1, 128>}, {transform_indices = @transform_3, window_bounds = array<i64: 8, 128>}]} {
    %c0 = arith.constant 0 : index
    %c0_0 = arith.constant 0 : index
    %0 = vector.load %arg1[%c0, %c0_0] : memref<8x128xf32, #tpu.memory_space<vmem>>, vector<8x128xf32>
    %c0_1 = arith.constant 0 : index
    %c0_2 = arith.constant 0 : index
    %1 = vector.load %arg3[%c0_1, %c0_2] : memref<1x128xf32, #tpu.memory_space<vmem>>, vector<1x128xf32>
    %c0_3 = arith.constant 0 : index
    %c0_4 = arith.constant 0 : index
    %2 = vector.load %arg2[%c0_3, %c0_4] : memref<128x128xf32, #tpu.memory_space<vmem>>, vector<128x128xf32>
    %cst = arith.constant dense<0.000000e+00> : vector<8x128xf32>
    %3 = tpu.matmul %0, %2, %cst {dimension_numbers = #tpu.dot_dimension_numbers<[1], [0], [0], [1], [0, 0, 1, 1], [], []>} : vector<8x128xf32>, vector<128x128xf32>, vector<8x128xf32> -> vector<8x128xf32>
    %4 = arith.mulf %0, %0 : vector<8x128xf32>
    %cst_5 = arith.constant dense<0.000000e+00> : vector<8xf32>
    %5 = vector.multi_reduction <add>, %4, %cst_5 [1] : vector<8x128xf32> to vector<8xf32>
    %6 = vector.shape_cast %5 : vector<8xf32> to vector<8x1xf32>
    %7 = math.sqrt %6 : vector<8x1xf32>
    %cst_6 = arith.constant 1.000000e-15 : f32
    %8 = vector.broadcast %cst_6 : f32 to vector<8x1xf32>
    %9 = arith.maximumf %7, %8 : vector<8x1xf32>
    %10 = arith.mulf %3, %3 : vector<8x128xf32>
    %cst_7 = arith.constant dense<0.000000e+00> : vector<8xf32>
    %11 = vector.multi_reduction <add>, %10, %cst_7 [1] : vector<8x128xf32> to vector<8xf32>
    %12 = vector.shape_cast %11 : vector<8xf32> to vector<8x1xf32>
    %13 = math.sqrt %12 : vector<8x1xf32>
    %cst_8 = arith.constant 1.000000e-15 : f32
    %14 = vector.broadcast %cst_8 : f32 to vector<8x1xf32>
    %15 = arith.maximumf %13, %14 : vector<8x1xf32>
    %cst_9 = arith.constant 0.000000e+00 : f32
    %16 = vector.broadcast %cst_9 : f32 to vector<8x1xf32>
    %17 = arith.cmpf ole, %12, %16 : vector<8x1xf32>
    %18 = arith.divf %15, %9 : vector<8x1xf32>
    %cst_10 = arith.constant 1.000000e+00 : f32
    %19 = vector.broadcast %cst_10 : f32 to vector<8x1xf32>
    %20 = arith.mulf %19, %9 : vector<8x1xf32>
    %cst_11 = arith.constant -1.000000e+00 : f32
    %cst_12 = arith.constant 1.000000e+00 : f32
    %21 = vector.broadcast %cst_11 : f32 to vector<8x1xf32>
    %22 = arith.maximumf %21, %20 : vector<8x1xf32>
    %23 = vector.broadcast %cst_12 : f32 to vector<8x1xf32>
    %24 = arith.minimumf %23, %22 : vector<8x1xf32>
    %25 = math.log1p %24 : vector<8x1xf32>
    %cst_13 = arith.constant 0.000000e+00 : f32
    %26 = vector.broadcast %cst_13 : f32 to vector<8x1xf32>
    %27 = arith.subf %26, %24 : vector<8x1xf32>
    %28 = math.log1p %27 : vector<8x1xf32>
    %29 = arith.subf %25, %28 : vector<8x1xf32>
    %cst_14 = arith.constant 5.000000e-01 : f32
    %30 = vector.broadcast %cst_14 : f32 to vector<8x1xf32>
    %31 = arith.mulf %30, %29 : vector<8x1xf32>
    %32 = arith.mulf %18, %31 : vector<8x1xf32>
    %33 = math.tanh %32 : vector<8x1xf32>
    %cst_15 = arith.constant 1.000000e+00 : f32
    %34 = vector.broadcast %cst_15 : f32 to vector<8x1xf32>
    %35 = arith.mulf %15, %34 : vector<8x1xf32>
    %36 = arith.divf %33, %35 : vector<8x1xf32>
    %cst_16 = arith.constant 1.000000e+00 : f32
    %37 = vector.broadcast %cst_16 : f32 to vector<8x1xf32>
    %38 = arith.divf %33, %37 : vector<8x1xf32>
    %cst_17 = arith.constant 1.000000e-15 : f32
    %39 = vector.broadcast %cst_17 : f32 to vector<8x1xf32>
    %40 = arith.maximumf %38, %39 : vector<8x1xf32>
    %cst_18 = arith.constant 0.995999991 : f32
    %41 = vector.broadcast %cst_18 : f32 to vector<8x1xf32>
    %42 = arith.cmpf ogt, %40, %41 : vector<8x1xf32>
    %cst_19 = arith.constant 0.995999991 : f32
    %43 = vector.broadcast %cst_19 : f32 to vector<8x1xf32>
    %44 = arith.divf %43, %40 : vector<8x1xf32>
    %cst_20 = arith.constant 1.000000e+00 : f32
    %45 = vector.broadcast %cst_20 : f32 to vector<8x1xf32>
    %46 = arith.select %42, %44, %45 : vector<8x1xi1>, vector<8x1xf32>
    %47 = arith.mulf %36, %46 : vector<8x1xf32>
    %cst_21 = arith.constant 0.000000e+00 : f32
    %48 = vector.broadcast %cst_21 : f32 to vector<8x1xf32>
    %49 = arith.select %17, %48, %47 : vector<8x1xi1>, vector<8x1xf32>
    %50 = vector.broadcast %1 : vector<1x128xf32> to vector<8x128xf32>
    %51 = arith.mulf %3, %50 : vector<8x128xf32>
    %cst_22 = arith.constant dense<0.000000e+00> : vector<8xf32>
    %52 = vector.multi_reduction <add>, %51, %cst_22 [1] : vector<8x128xf32> to vector<8xf32>
    %53 = vector.shape_cast %52 : vector<8xf32> to vector<8x1xf32>
    %54 = arith.mulf %1, %1 : vector<1x128xf32>
    %cst_23 = arith.constant dense<0.000000e+00> : vector<1xf32>
    %55 = vector.multi_reduction <add>, %54, %cst_23 [1] : vector<1x128xf32> to vector<1xf32>
    %56 = vector.shape_cast %55 : vector<1xf32> to vector<1x1xf32>
    %57 = arith.mulf %49, %53 : vector<8x1xf32>
    %58 = arith.mulf %49, %49 : vector<8x1xf32>
    %59 = arith.mulf %58, %12 : vector<8x1xf32>
    %cst_24 = arith.constant 2.000000e+00 : f32
    %60 = vector.broadcast %cst_24 : f32 to vector<8x1xf32>
    %61 = arith.mulf %60, %57 : vector<8x1xf32>
    %cst_25 = arith.constant 1.000000e+00 : f32
    %62 = vector.broadcast %cst_25 : f32 to vector<8x1xf32>
    %63 = arith.addf %62, %61 : vector<8x1xf32>
    %cst_26 = arith.constant 1.000000e+00 : f32
    %64 = vector.broadcast %cst_26 : f32 to vector<1x1xf32>
    %65 = arith.mulf %64, %56 : vector<1x1xf32>
    %66 = vector.broadcast %65 : vector<1x1xf32> to vector<8x1xf32>
    %67 = arith.addf %63, %66 : vector<8x1xf32>
    %68 = arith.mulf %67, %49 : vector<8x1xf32>
    %cst_27 = arith.constant 1.000000e+00 : f32
    %69 = vector.broadcast %cst_27 : f32 to vector<8x1xf32>
    %70 = arith.mulf %69, %59 : vector<8x1xf32>
    %cst_28 = arith.constant 1.000000e+00 : f32
    %71 = vector.broadcast %cst_28 : f32 to vector<8x1xf32>
    %72 = arith.subf %71, %70 : vector<8x1xf32>
    %73 = vector.broadcast %68 : vector<8x1xf32> to vector<8x128xf32>
    %74 = arith.mulf %73, %3 : vector<8x128xf32>
    %75 = vector.broadcast %72 : vector<8x1xf32> to vector<8x128xf32>
    %76 = vector.broadcast %1 : vector<1x128xf32> to vector<8x128xf32>
    %77 = arith.mulf %75, %76 : vector<8x128xf32>
    %78 = arith.addf %74, %77 : vector<8x128xf32>
    %cst_29 = arith.constant 1.000000e+00 : f32
    %79 = vector.broadcast %cst_29 : f32 to vector<8x1xf32>
    %80 = arith.mulf %79, %59 : vector<8x1xf32>
    %81 = vector.broadcast %56 : vector<1x1xf32> to vector<8x1xf32>
    %82 = arith.mulf %80, %81 : vector<8x1xf32>
    %83 = arith.addf %63, %82 : vector<8x1xf32>
    %cst_30 = arith.constant 1.000000e-15 : f32
    %84 = vector.broadcast %cst_30 : f32 to vector<8x1xf32>
    %85 = arith.maximumf %83, %84 : vector<8x1xf32>
    %86 = tpu.reciprocal %85 : vector<8x1xf32> -> vector<8x1xf32>
    %87 = arith.mulf %78, %78 : vector<8x128xf32>
    %cst_31 = arith.constant dense<0.000000e+00> : vector<8xf32>
    %88 = vector.multi_reduction <add>, %87, %cst_31 [1] : vector<8x128xf32> to vector<8xf32>
    %89 = vector.shape_cast %88 : vector<8xf32> to vector<8x1xf32>
    %90 = math.sqrt %89 : vector<8x1xf32>
    %91 = arith.mulf %90, %86 : vector<8x1xf32>
    %cst_32 = arith.constant 1.000000e-15 : f32
    %92 = vector.broadcast %cst_32 : f32 to vector<8x1xf32>
    %93 = arith.maximumf %91, %92 : vector<8x1xf32>
    %cst_33 = arith.constant 0.995999991 : f32
    %94 = vector.broadcast %cst_33 : f32 to vector<8x1xf32>
    %95 = arith.cmpf ogt, %93, %94 : vector<8x1xf32>
    %cst_34 = arith.constant 0.995999991 : f32
    %96 = vector.broadcast %cst_34 : f32 to vector<8x1xf32>
    %97 = arith.divf %96, %93 : vector<8x1xf32>
    %cst_35 = arith.constant 1.000000e+00 : f32
    %98 = vector.broadcast %cst_35 : f32 to vector<8x1xf32>
    %99 = arith.select %95, %97, %98 : vector<8x1xi1>, vector<8x1xf32>
    %100 = arith.mulf %86, %99 : vector<8x1xf32>
    %101 = vector.broadcast %100 : vector<8x1xf32> to vector<8x128xf32>
    %102 = arith.mulf %78, %101 : vector<8x128xf32>
    %c0_36 = arith.constant 0 : index
    %c0_37 = arith.constant 0 : index
    %103 = vector.load %arg4[%c0_36, %c0_37] : memref<8x128xf32, #tpu.memory_space<vmem>>, vector<8x128xf32>
    tpu.vector_store %arg4[%c0_36, %c0_37], %102 {strides = array<i32>} : memref<8x128xf32, #tpu.memory_space<vmem>>, vector<8x128xf32>,
    return
  }
  func.func @transform_0(%arg0: i32) -> (i32, i32) {
    %c0_i32 = arith.constant 0 : i32
    %c0_i32_0 = arith.constant 0 : i32
    return %arg0, %c0_i32 : i32, i32
  }
  func.func @transform_1(%arg0: i32) -> (i32, i32) {
    %c0_i32 = arith.constant 0 : i32
    %c0_i32_0 = arith.constant 0 : i32
    %c0_i32_1 = arith.constant 0 : i32
    return %c0_i32, %c0_i32_0 : i32, i32
  }
  func.func @transform_2(%arg0: i32) -> (i32, i32) {
    %c0_i32 = arith.constant 0 : i32
    %c0_i32_0 = arith.constant 0 : i32
    %c0_i32_1 = arith.constant 0 : i32
    return %c0_i32, %c0_i32_0 : i32, i32
  }
  func.func @transform_3(%arg0: i32) -> (i32, i32) {
    %c0_i32 = arith.constant 0 : i32
    %c0_i32_0 = arith.constant 0 : i32
    return %arg0, %c0_i32 : i32, i32
  }
}

module attributes {stable_mosaic.version = 11 : i64} {
  func.func @_hyp_linear_resident_kernel(%arg0: i32, %arg1: memref<8x128xf32, #tpu.memory_space<vmem>>, %arg2: memref<128x128xf32, #tpu.memory_space<vmem>>, %arg3: memref<1x128xf32, #tpu.memory_space<vmem>>, %arg4: memref<8x128xf32, #tpu.memory_space<vmem>>) attributes {dimension_semantics = [#tpu.dimension_semantics<parallel>], iteration_bounds = array<i64: 1>, scalar_prefetch = 0 : i64, scratch_operands = 0 : i64, tpu.core_type = #tpu.core_type<tc>, window_params = [{transform_indices = @transform_0, window_bounds = array<i64: 8, 128>}, {pipeline_mode = #tpu.pipeline_mode<synchronous>, transform_indices = @transform_1, window_bounds = array<i64: 128, 128>}, {pipeline_mode = #tpu.pipeline_mode<synchronous>, transform_indices = @transform_2, window_bounds = array<i64: 1, 128>}, {transform_indices = @transform_3, window_bounds = array<i64: 8, 128>}]} {
    %c0 = arith.constant 0 : index
    %c0_0 = arith.constant 0 : index
    %0 = vector.load %arg1[%c0, %c0_0] : memref<8x128xf32, #tpu.memory_space<vmem>>, vector<8x128xf32>
    %c0_1 = arith.constant 0 : index
    %c0_2 = arith.constant 0 : index
    %1 = vector.load %arg3[%c0_1, %c0_2] : memref<1x128xf32, #tpu.memory_space<vmem>>, vector<1x128xf32>
    %c0_3 = arith.constant 0 : index
    %c0_4 = arith.constant 0 : index
    %2 = vector.load %arg2[%c0_3, %c0_4] : memref<128x128xf32, #tpu.memory_space<vmem>>, vector<128x128xf32>
    %cst = arith.constant dense<0.000000e+00> : vector<8x128xf32>
    %3 = tpu.matmul %0, %2, %cst {dimension_numbers = #tpu.dot_dimension_numbers<[1], [0], [0], [1], [0, 0, 1, 1], [], []>} : vector<8x128xf32>, vector<128x128xf32>, vector<8x128xf32> -> vector<8x128xf32>
    %4 = arith.mulf %0, %0 : vector<8x128xf32>
    %cst_5 = arith.constant dense<0.000000e+00> : vector<8xf32>
    %5 = vector.multi_reduction <add>, %4, %cst_5 [1] : vector<8x128xf32> to vector<8xf32>
    %6 = vector.shape_cast %5 : vector<8xf32> to vector<8x1xf32>
    %7 = math.sqrt %6 : vector<8x1xf32>
    %cst_6 = arith.constant 1.000000e-15 : f32
    %8 = vector.broadcast %cst_6 : f32 to vector<8x1xf32>
    %9 = arith.maximumf %7, %8 : vector<8x1xf32>
    %10 = arith.mulf %3, %3 : vector<8x128xf32>
    %cst_7 = arith.constant dense<0.000000e+00> : vector<8xf32>
    %11 = vector.multi_reduction <add>, %10, %cst_7 [1] : vector<8x128xf32> to vector<8xf32>
    %12 = vector.shape_cast %11 : vector<8xf32> to vector<8x1xf32>
    %13 = math.sqrt %12 : vector<8x1xf32>
    %cst_8 = arith.constant 1.000000e-15 : f32
    %14 = vector.broadcast %cst_8 : f32 to vector<8x1xf32>
    %15 = arith.maximumf %13, %14 : vector<8x1xf32>
    %cst_9 = arith.constant 0.000000e+00 : f32
    %16 = vector.broadcast %cst_9 : f32 to vector<8x1xf32>
    %17 = arith.cmpf ole, %12, %16 : vector<8x1xf32>
    %18 = arith.divf %15, %9 : vector<8x1xf32>
    %cst_10 = arith.constant 1.000000e+00 : f32
    %19 = vector.broadcast %cst_10 : f32 to vector<8x1xf32>
    %20 = arith.mulf %19, %9 : vector<8x1xf32>
    %cst_11 = arith.constant -1.000000e+00 : f32
    %cst_12 = arith.constant 1.000000e+00 : f32
    %21 = vector.broadcast %cst_11 : f32 to vector<8x1xf32>
    %22 = arith.maximumf %21, %20 : vector<8x1xf32>
    %23 = vector.broadcast %cst_12 : f32 to vector<8x1xf32>
    %24 = arith.minimumf %23, %22 : vector<8x1xf32>
    %25 = math.log1p %24 : vector<8x1xf32>
    %cst_13 = arith.constant 0.000000e+00 : f32
    %26 = vector.broadcast %cst_13 : f32 to vector<8x1xf32>
    %27 = arith.subf %26, %24 : vector<8x1xf32>
    %28 = math.log1p %27 : vector<8x1xf32>
    %29 = arith.subf %25, %28 : vector<8x1xf32>
    %cst_14 = arith.constant 5.000000e-01 : f32
    %30 = vector.broadcast %cst_14 : f32 to vector<8x1xf32>
    %31 = arith.mulf %30, %29 : vector<8x1xf32>
    %32 = arith.mulf %18, %31 : vector<8x1xf32>
    %33 = math.tanh %32 : vector<8x1xf32>
    %cst_15 = arith.constant 1.000000e+00 : f32
    %34 = vector.broadcast %cst_15 : f32 to vector<8x1xf32>
    %35 = arith.mulf %15, %34 : vector<8x1xf32>
    %36 = arith.divf %33, %35 : vector<8x1xf32>
    %cst_16 = arith.constant 1.000000e+00 : f32
    %37 = vector.broadcast %cst_16 : f32 to vector<8x1xf32>
    %38 = arith.divf %33, %37 : vector<8x1xf32>
    %cst_17 = arith.constant 1.000000e-15 : f32
    %39 = vector.broadcast %cst_17 : f32 to vector<8x1xf32>
    %40 = arith.maximumf %38, %39 : vector<8x1xf32>
    %cst_18 = arith.constant 0.995999991 : f32
    %41 = vector.broadcast %cst_18 : f32 to vector<8x1xf32>
    %42 = arith.cmpf ogt, %40, %41 : vector<8x1xf32>
    %cst_19 = arith.constant 0.995999991 : f32
    %43 = vector.broadcast %cst_19 : f32 to vector<8x1xf32>
    %44 = arith.divf %43, %40 : vector<8x1xf32>
    %cst_20 = arith.constant 1.000000e+00 : f32
    %45 = vector.broadcast %cst_20 : f32 to vector<8x1xf32>
    %46 = arith.select %42, %44, %45 : vector<8x1xi1>, vector<8x1xf32>
    %47 = arith.mulf %36, %46 : vector<8x1xf32>
    %cst_21 = arith.constant 0.000000e+00 : f32
    %48 = vector.broadcast %cst_21 : f32 to vector<8x1xf32>
    %49 = arith.select %17, %48, %47 : vector<8x1xi1>, vector<8x1xf32>
    %50 = vector.broadcast %1 : vector<1x128xf32> to vector<8x128xf32>
    %51 = arith.mulf %3, %50 : vector<8x128xf32>
    %cst_22 = arith.constant dense<0.000000e+00> : vector<8xf32>
    %52 = vector.multi_reduction <add>, %51, %cst_22 [1] : vector<8x128xf32> to vector<8xf32>
    %53 = vector.shape_cast %52 : vector<8xf32> to vector<8x1xf32>
    %54 = arith.mulf %1, %1 : vector<1x128xf32>
    %cst_23 = arith.constant dense<0.000000e+00> : vector<1xf32>
    %55 = vector.multi_reduction <add>, %54, %cst_23 [1] : vector<1x128xf32> to vector<1xf32>
    %56 = vector.shape_cast %55 : vector<1xf32> to vector<1x1xf32>
    %57 = arith.mulf %49, %53 : vector<8x1xf32>
    %58 = arith.mulf %49, %49 : vector<8x1xf32>
    %59 = arith.mulf %58, %12 : vector<8x1xf32>
    %cst_24 = arith.constant 2.000000e+00 : f32
    %60 = vector.broadcast %cst_24 : f32 to vector<8x1xf32>
    %61 = arith.mulf %60, %57 : vector<8x1xf32>
    %cst_25 = arith.constant 1.000000e+00 : f32
    %62 = vector.broadcast %cst_25 : f32 to vector<8x1xf32>
    %63 = arith.addf %62, %61 : vector<8x1xf32>
    %cst_26 = arith.constant 1.000000e+00 : f32
    %64 = vector.broadcast %cst_26 : f32 to vector<1x1xf32>
    %65 = arith.mulf %64, %56 : vector<1x1xf32>
    %66 = vector.broadcast %65 : vector<1x1xf32> to vector<8x1xf32>
    %67 = arith.addf %63, %66 : vector<8x1xf32>
    %68 = arith.mulf %67, %49 : vector<8x1xf32>
    %cst_27 = arith.constant 1.000000e+00 : f32
    %69 = vector.broadcast %cst_27 : f32 to vector<8x1xf32>
    %70 = arith.mulf %69, %59 : vector<8x1xf32>
    %cst_28 = arith.constant 1.000000e+00 : f32
    %71 = vector.broadcast %cst_28 : f32 to vector<8x1xf32>
    %72 = arith.subf %71, %70 : vector<8x1xf32>
    %73 = vector.broadcast %68 : vector<8x1xf32> to vector<8x128xf32>
    %74 = arith.mulf %73, %3 : vector<8x128xf32>
    %75 = vector.broadcast %72 : vector<8x1xf32> to vector<8x128xf32>
    %76 = vector.broadcast %1 : vector<1x128xf32> to vector<8x128xf32>
    %77 = arith.mulf %75, %76 : vector<8x128xf32>
    %78 = arith.addf %74, %77 : vector<8x128xf32>
    %cst_29 = arith.constant 1.000000e+00 : f32
    %79 = vector.broadcast %cst_29 : f32 to vector<8x1xf32>
    %80 = arith.mulf %79, %59 : vector<8x1xf32>
    %81 = vector.broadcast %56 : vector<1x1xf32> to vector<8x1xf32>
    %82 = arith.mulf %80, %81 : vector<8x1xf32>
    %83 = arith.addf %63, %82 : vector<8x1xf32>
    %cst_30 = arith.constant 1.000000e-15 : f32
    %84 = vector.broadcast %cst_30 : f32 to vector<8x1xf32>
    %85 = arith.maximumf %83, %84 : vector<8x1xf32>
    %86 = tpu.reciprocal %85 : vector<8x1xf32> -> vector<8x1xf32>
    %87 = arith.mulf %78, %78 : vector<8x128xf32>
    %cst_31 = arith.constant dense<0.000000e+00> : vector<8xf32>
    %88 = vector.multi_reduction <add>, %87, %cst_31 [1] : vector<8x128xf32> to vector<8xf32>
    %89 = vector.shape_cast %88 : vector<8xf32> to vector<8x1xf32>
    %90 = math.sqrt %89 : vector<8x1xf32>
    %91 = arith.mulf %90, %86 : vector<8x1xf32>
    %cst_32 = arith.constant 1.000000e-15 : f32
    %92 = vector.broadcast %cst_32 : f32 to vector<8x1xf32>
    %93 = arith.maximumf %91, %92 : vector<8x1xf32>
    %cst_33 = arith.constant 0.995999991 : f32
    %94 = vector.broadcast %cst_33 : f32 to vector<8x1xf32>
    %95 = arith.cmpf ogt, %93, %94 : vector<8x1xf32>
    %cst_34 = arith.constant 0.995999991 : f32
    %96 = vector.broadcast %cst_34 : f32 to vector<8x1xf32>
    %97 = arith.divf %96, %93 : vector<8x1xf32>
    %cst_35 = arith.constant 1.000000e+00 : f32
    %98 = vector.broadcast %cst_35 : f32 to vector<8x1xf32>
    %99 = arith.select %95, %97, %98 : vector<8x1xi1>, vector<8x1xf32>
    %100 = arith.mulf %86, %99 : vector<8x1xf32>
    %101 = vector.broadcast %100 : vector<8x1xf32> to vector<8x128xf32>
    %102 = arith.mulf %78, %101 : vector<8x128xf32>
    %c0_36 = arith.constant 0 : index
    %c0_37 = arith.constant 0 : index
    %103 = vector.load %arg4[%c0_36, %c0_37] : memref<8x128xf32, #tpu.memory_space<vmem>>, vector<8x128xf32>
    tpu.vector_store %arg4[%c0_36, %c0_37], %102 {strides = array<i32>} : memref<8x128xf32, #tpu.memory_space<vmem>>, vector<8x128xf32>,
    return
  }
  func.func @transform_0(%arg0: i32) -> (i32, i32) {
    %c0_i32 = arith.constant 0 : i32
    %c0_i32_0 = arith.constant 0 : i32
    return %arg0, %c0_i32 : i32, i32
  }
  func.func @transform_1(%arg0: i32) -> (i32, i32) {
    %c0_i32 = arith.constant 0 : i32
    %c0_i32_0 = arith.constant 0 : i32
    %c0_i32_1 = arith.constant 0 : i32
    return %c0_i32, %c0_i32_0 : i32, i32
  }
  func.func @transform_2(%arg0: i32) -> (i32, i32) {
    %c0_i32 = arith.constant 0 : i32
    %c0_i32_0 = arith.constant 0 : i32
    %c0_i32_1 = arith.constant 0 : i32
    return %c0_i32, %c0_i32_0 : i32, i32
  }
  func.func @transform_3(%arg0: i32) -> (i32, i32) {
    %c0_i32 = arith.constant 0 : i32
    %c0_i32_0 = arith.constant 0 : i32
    return %arg0, %c0_i32 : i32, i32
  }
}

</mosaic_0001>

<llo_original>
// kernel: tpu_custom_call.1
$region0: #{tpu_custom_call.1}
  #allocation0 [shape = 'u32[]', space=smem, size = 0x4, offset = 0x4, fixed_abs, tag = 'smem constant byte address 0x4 - core index']
  #allocation1 [shape = 'u32[144,128]{1,0:T(1,128)}', space=vmem, size = 0x12000, scoped, tag = 'internal scratch']
  %s0 = inlined_call_operand.hbm [shape: f32[8,128], index: 0, kind: input, shape index: {}]
  %s1 = inlined_call_operand.hbm [shape: f32[128,128], index: 1, kind: input, shape index: {}]
  %s2 = inlined_call_operand.vmem [shape: f32[1,128], index: 2, kind: input, shape index: {}]
  %s3 = inlined_call_operand.hbm [shape: f32[8,128], index: 3, kind: output, shape index: {}]
  %s4 = sld [smem:[#allocation0]]
  $region30: #{tpu_custom_call.1} parent=0
    _
  %s6 = ssub.s32 1, %s4
  %s7 = scalar_select 0, %s6, %s4
  $region1: #{tpu_custom_call.1} parent=0
    #allocation2 [shape = 'u8[4096]{0}', space=vmem, size = 0x1000, scoped, tag = 'input window, operand 0, single buffered']
    #allocation3 [shape = 's32[1]{0}', space=sflag, size = 0x4, scoped, tag = 'scoped memory for tpu_custom_call.1']
    #allocation4 [shape = 's32[1]{0}', space=sflag, size = 0x4, scoped, tag = 'scoped memory for tpu_custom_call.1']
    #allocation5 [shape = 'u8[65536]{0}', space=vmem, size = 0x10000, scoped, tag = 'input window, operand 1, single buffered']
    #allocation6 [shape = 's32[1]{0}', space=sflag, size = 0x4, scoped, tag = 'scoped memory for tpu_custom_call.1']
    #allocation7 [shape = 'u8[4096]{0}', space=vmem, size = 0x1000, scoped, tag = 'output window, operand 0, single buffered']
    %8 = vsyncpa [#allocation3], 0
    %9 = vsyncpa [#allocation6], 0
    %10 = vsyncpa [#allocation4], 0
    // Predicated region
    $region2: #{tpu_custom_call.1} parent=1 // pred_check
      _
    $region3: #{tpu_custom_call.1} parent=1 // pred_check_branch
      %12 = sbr.rel (0) target = $region5
    $region4: #{tpu_custom_call.1} parent=1 // pred_region
      %s14 = ssub.s32 128, 128
      %15 = vsyncadd [#allocation3], %s14
      %s17 = sshll.u32 [#allocation2], 4
      %s18 = int_to_ptr.vmem [resolvable:$true] %s17
      %20 = dma.hbm_to_vmem [thread:$0]  %s0, 128, %s18, [#allocation3]
    $region5: #{tpu_custom_call.1} parent=1 // pred_fallthru
      _
    // Predicated region
    $region6: #{tpu_custom_call.1} parent=1 // pred_check
      _
    $region7: #{tpu_custom_call.1} parent=1 // pred_check_branch
      %22 = sbr.rel (0) target = $region9
    $region8: #{tpu_custom_call.1} parent=1 // pred_region
      %s24 = ssub.s32 2048, 2048
      %25 = vsyncadd [#allocation6], %s24
      %s26 = sshll.u32 [#allocation5], 4
      %s27 = int_to_ptr.vmem [resolvable:$true] %s26
      %32 = dma.hbm_to_vmem [thread:$0]  %s1, 2048, %s27, [#allocation6], 128, 128, 8
    $region9: #{tpu_custom_call.1} parent=1 // pred_fallthru
      _
    // Predicated region
    $region10: #{tpu_custom_call.1} parent=1 // pred_check
      _
    $region11: #{tpu_custom_call.1} parent=1 // pred_check_branch
      %34 = sbr.rel (0) target = $region13
    $region12: #{tpu_custom_call.1} parent=1 // pred_region
      _
    $region13: #{tpu_custom_call.1} parent=1 // pred_fallthru
      _
    // Predicated region
    $region14: #{tpu_custom_call.1} parent=1 // pred_check
      _
    $region15: #{tpu_custom_call.1} parent=1 // pred_check_branch
      %36 = sbr.rel (0) target = $region17
    $region16: #{tpu_custom_call.1} parent=1 // pred_region
      %37 = dma.done [#allocation3], 128
    $region17: #{tpu_custom_call.1} parent=1 // pred_fallthru
      _
    // Predicated region
    $region18: #{tpu_custom_call.1} parent=1 // pred_check
      _
    $region19: #{tpu_custom_call.1} parent=1 // pred_check_branch
      %39 = sbr.rel (0) target = $region21
    $region20: #{tpu_custom_call.1} parent=1 // pred_region
      %40 = dma.done [#allocation6], 2048
    $region21: #{tpu_custom_call.1} parent=1 // pred_fallthru
      _
    %v41 = vld [vmem:[#allocation2] sm:$0xff]
    %v42 = vld [vmem:[%s2] sm:$0x1]
    %v43 = vld [vmem:[#allocation5] sm:$0xff]
    %v44 = vld [vmem:[#allocation5 + $0x8] sm:$0xff]
    %v45 = vld [vmem:[#allocation5 + $0x10] sm:$0xff]
    %v46 = vld [vmem:[#allocation5 + $0x18] sm:$0xff]
    %v47 = vld [vmem:[#allocation5 + $0x20] sm:$0xff]
    %v48 = vld [vmem:[#allocation5 + $0x28] sm:$0xff]
    %v49 = vld [vmem:[#allocation5 + $0x30] sm:$0xff]
    %v50 = vld [vmem:[#allocation5 + $0x38] sm:$0xff]
    %v51 = vld [vmem:[#allocation5 + $0x40] sm:$0xff]
    %v52 = vld [vmem:[#allocation5 + $0x48] sm:$0xff]
    %v53 = vld [vmem:[#allocation5 + $0x50] sm:$0xff]
    %v54 = vld [vmem:[#allocation5 + $0x58] sm:$0xff]
    %v55 = vld [vmem:[#allocation5 + $0x60] sm:$0xff]
    %v56 = vld [vmem:[#allocation5 + $0x68] sm:$0xff]
    %v57 = vld [vmem:[#allocation5 + $0x70] sm:$0xff]
    %v58 = vld [vmem:[#allocation5 + $0x78] sm:$0xff]
    %59 = vmatprep.subr.mxu0 0.0
    %60 = vmatpush1.msra.mxu0 %v43
    %61 = vmatprep.subr.mxu0 0.0
    %62 = vmatpush1.msra.mxu0 %v44
    %63 = vmatprep.subr.mxu0 0.0
    %64 = vmatpush1.msra.mxu0 %v45
    %65 = vmatprep.subr.mxu0 0.0
    %66 = vmatpush1.msra.mxu0 %v46
    %67 = vmatprep.subr.mxu0 0.0
    %68 = vmatpush1.msra.mxu0 %v47
    %69 = vmatprep.subr.mxu0 0.0
    %70 = vmatpush1.msra.mxu0 %v48
    %71 = vmatprep.subr.mxu0 0.0
    %72 = vmatpush1.msra.mxu0 %v49
    %73 = vmatprep.subr.mxu0 0.0
    %74 = vmatpush1.msra.mxu0 %v50
    %75 = vmatprep.subr.mxu0 0.0
    %76 = vmatpush1.msra.mxu0 %v51
    %77 = vmatprep.subr.mxu0 0.0
    %78 = vmatpush1.msra.mxu0 %v52
    %79 = vmatprep.subr.mxu0 0.0
    %80 = vmatpush1.msra.mxu0 %v53
    %81 = vmatprep.subr.mxu0 0.0
    %82 = vmatpush1.msra.mxu0 %v54
    %83 = vmatprep.subr.mxu0 0.0
    %84 = vmatpush1.msra.mxu0 %v55
    %85 = vmatprep.subr.mxu0 0.0
    %86 = vmatpush1.msra.mxu0 %v56
    %87 = vmatprep.subr.mxu0 0.0
    %88 = vmatpush1.msra.mxu0 %v57
    %89 = vmatprep.subr.mxu0 0.0
    %90 = vmatpush1.msra.mxu0 %v58
    %91 = vmatprep.subr.mxu0 0.0
    %92 = vmatpush1.msra.mxu0 0.0
    %93 = vmatprep.subr.mxu0 0.0
    %94 = vmatpush1.msra.mxu0 0.0
    %95 = vmatprep.subr.mxu0 0.0
    %96 = vmatpush1.msra.mxu0 0.0
    %97 = vmatprep.subr.mxu0 0.0
    %98 = vmatpush1.msra.mxu0 0.0
    %99 = vmatprep.subr.mxu0 0.0
    %100 = vmatpush1.msra.mxu0 0.0
    %101 = vmatprep.subr.mxu0 0.0
    %102 = vmatpush1.msra.mxu0 0.0
    %103 = vmatprep.subr.mxu0 0.0
    %104 = vmatpush1.msra.mxu0 0.0
    %105 = vmatprep.subr.mxu0 0.0
    %106 = vmatpush1.msra.mxu0 0.0
    %107 = vmatprep.subr.mxu0 0.0
    %108 = vmatpush1.msra.mxu0 0.0
    %109 = vmatprep.subr.mxu0 0.0
    %110 = vmatpush1.msra.mxu0 0.0
    %111 = vmatprep.subr.mxu0 0.0
    %112 = vmatpush1.msra.mxu0 0.0
    %113 = vmatprep.subr.mxu0 0.0
    %114 = vmatpush1.msra.mxu0 0.0
    %115 = vmatprep.subr.mxu0 0.0
    %116 = vmatpush1.msra.mxu0 0.0
    %117 = vmatprep.subr.mxu0 0.0
    %118 = vmatpush1.msra.mxu0 0.0
    %119 = vmatprep.subr.mxu0 0.0
    %120 = vmatpush1.msra.mxu0 0.0
    %121 = vmatprep.subr.mxu0 0.0
    %122 = vmatpush1.msra.mxu0 0.0
    %123 = vmatprep.mubr.f32.mxu0 0.0
    %124 = vmatmul.mubr.f32.gmra.mrb[0].mxu0 %v41
    %v125 = vpop.f32.mrb[0].mxu0
    %v126 = vadd.f32 0.0, %v125
    %v127 = vpop.f32.mrb[0].mxu0
    %128 = vdwg.mxu0
    %v129 = vmul.f32 %v41, %v41
    %130 = vadd.xlane.f32.xlu0 %v129
    %v131 = vpop.xlane.xlu0 %130
    %v132 = vrsqrt.pop %v131
    %v133 = vmul.f32 %v131, %v132
    %vm134 = vcmp.eq.f32.partialorder %v131, inf
    %v135 = vsel %vm134, %v131, %v133
    %vm136 = vcmp.eq.f32.partialorder %v131, 0.0
    %v137 = vand.u32 %v131, 2147483648
    %v138 = vsel %vm136, %v137, %v135
    %v139 = vmax.f32 %v138, 1e-15
    %v140 = vmul.f32 %v126, %v126
    %141 = vadd.xlane.f32.xlu0 %v140
    %v142 = vpop.xlane.xlu0 %141
    %v143 = vrsqrt.pop %v142
    %v144 = vmul.f32 %v142, %v143
    %vm145 = vcmp.eq.f32.partialorder %v142, inf
    %v146 = vsel %vm145, %v142, %v144
    %vm147 = vcmp.eq.f32.partialorder %v142, 0.0
    %v148 = vand.u32 %v142, 2147483648
    %v149 = vsel %vm147, %v148, %v146
    %v150 = vmax.f32 %v149, 1e-15
    %vm151 = vcmp.le.f32.partialorder %v142, 0.0
    %v152 = vrcp.pop %v139
    %v153 = vmul.f32 %v150, %v152
    %v154 = vmax.f32 %v139, -1.0
    %v155 = vmin.f32 %v154, 1.0
    %v156 = vadd.f32 %v155, 1.0
    %v157 = vlog2.pop %v156
    %v158 = vmul.f32 %v157, 0.6931472
    %v159 = vmul.f32 -0.5, %v155
    %v160 = vadd.f32 %v159, 1.0
    %v161 = vmul.f32 %v160, %v155
    %v162 = vand.u32 2147483647, %v155
    %vm163 = vcmp.lt.f32.partialorder %v162, 0.0004427343
    %v164 = vsel %vm163, %v161, %v158
    %v165 = vsub.f32 0.0, %v155
    %v166 = vadd.f32 %v165, 1.0
    %v167 = vlog2.pop %v166
    %v168 = vmul.f32 %v167, 0.6931472
    %v169 = vmul.f32 -0.5, %v165
    %v170 = vadd.f32 %v169, 1.0
    %v171 = vmul.f32 %v170, %v165
    %v172 = vand.u32 2147483647, %v165
    %vm173 = vcmp.lt.f32.partialorder %v172, 0.0004427343
    %v174 = vsel %vm173, %v171, %v168
    %v175 = vsub.f32 %v164, %v174
    %v176 = vmul.f32 %v175, 0.5
    %v177 = vmul.f32 %v153, %v176
    %v178 = vtanh.pop %v177
    %v179 = vrcp.pop %v150
    %v180 = vmul.f32 %v178, %v179
    %v181 = vmax.f32 %v178, 1e-15
    %vm182 = vcmp.gt.f32.partialorder %v181, 0.996
    %v183 = vrcp.pop %v181
    %v184 = vmul.f32 0.996, %v183
    %v185 = vsel %vm182, %v184, 1.0
    %v186 = vmul.f32 %v180, %v185
    %v187 = vsel %vm151, 0.0, %v186
    %v189 = vlaneseq
    %v190 = vshrl.u32 %v189, 7
    %v191 = vsub.s32 0, %v190
    %v192 = vrot.slane %v42, %v191
    %v194 = vmul.f32 %v126, %v192
    %195 = vadd.xlane.f32.xlu0 %v194
    %v196 = vpop.xlane.xlu0 %195
    %v197 = vmul.f32 %v42, %v42
    %vm198 = vcmask 1040384
    %v199 = vsel %vm198, %v197, 0.0
    %200 = vadd.xlane.f32.xlu0 %v199
    %v201 = vpop.xlane.xlu0 %200
    %v202 = vmul.f32 %v187, %v196
    %v203 = vmul.f32 %v187, %v187
    %v204 = vmul.f32 %v203, %v142
    %v205 = vmul.f32 %v202, 2.0
    %v206 = vadd.f32 %v205, 1.0
    %v207 = vlaneseq
    %v208 = vshrl.u32 %v207, 7
    %v209 = vsub.s32 0, %v208
    %v210 = vrot.slane %v201, %v209
    %v211 = vadd.f32 %v206, %v210
    %v212 = vmul.f32 %v211, %v187
    %v213 = vsub.f32 1.0, %v204
    %v214 = vmul.f32 %v212, %v126
    %v215 = vmul.f32 %v213, %v192
    %v216 = vadd.f32 %v214, %v215
    %v217 = vmul.f32 %v204, %v210
    %v218 = vadd.f32 %v206, %v217
    %v219 = vmax.f32 %v218, 1e-15
    %v220 = vrcp.pop %v219
    %v221 = vmul.f32 %v216, %v216
    %222 = vadd.xlane.f32.xlu0 %v221
    %v223 = vpop.xlane.xlu0 %222
    %v224 = vrsqrt.pop %v223
    %v225 = vmul.f32 %v223, %v224
    %vm226 = vcmp.eq.f32.partialorder %v223, inf
    %v227 = vsel %vm226, %v223, %v225
    %vm228 = vcmp.eq.f32.partialorder %v223, 0.0
    %v229 = vand.u32 %v223, 2147483648
    %v230 = vsel %vm228, %v229, %v227
    %v231 = vmul.f32 %v230, %v220
    %v232 = vmax.f32 %v231, 1e-15
    %vm233 = vcmp.gt.f32.partialorder %v232, 0.996
    %v234 = vrcp.pop %v232
    %v235 = vmul.f32 0.996, %v234
    %v236 = vsel %vm233, %v235, 1.0
    %v237 = vmul.f32 %v220, %v236
    %v238 = vmul.f32 %v216, %v237
    %239 = vst [vmem:[#allocation7] sm:$0xff] %v238
    // Predicated region
    $region22: #{tpu_custom_call.1} parent=1 // pred_check
      _
    $region23: #{tpu_custom_call.1} parent=1 // pred_check_branch
      %241 = sbr.rel (0) target = $region25
    $region24: #{tpu_custom_call.1} parent=1 // pred_region
      %s243 = ssub.s32 128, 128
      %244 = vsyncadd [#allocation4], %s243
      %s246 = sshll.u32 [#allocation7], 4
      %s247 = int_to_ptr.vmem [resolvable:$true] %s246
      %249 = dma.vmem_to_hbm [thread:$0]  %s247, 128, %s3, [#allocation4]
    $region25: #{tpu_custom_call.1} parent=1 // pred_fallthru
      _
    // Predicated region
    $region26: #{tpu_custom_call.1} parent=1 // pred_check
      _
    $region27: #{tpu_custom_call.1} parent=1 // pred_check_branch
      %251 = sbr.rel (0) target = $region29
    $region28: #{tpu_custom_call.1} parent=1 // pred_region
      %252 = dma.done [#allocation4], 128
    $region29: #{tpu_custom_call.1} parent=1 // pred_fallthru
      _
    %253 = vsyncpa [#allocation3], 1
    %254 = vsyncpa [#allocation6], 1
    %255 = vsyncpa [#allocation4], 1

// kernel: tpu_custom_call.1
$region0: #{tpu_custom_call.1}
  #allocation0 [shape = 'u32[]', space=smem, size = 0x4, offset = 0x4, fixed_abs, tag = 'smem constant byte address 0x4 - core index']
  #allocation1 [shape = 'u32[144,128]{1,0:T(1,128)}', space=vmem, size = 0x12000, scoped, tag = 'internal scratch']
  %s0 = inlined_call_operand.hbm [shape: f32[8,128], index: 0, kind: input, shape index: {}]
  %s1 = inlined_call_operand.hbm [shape: f32[128,128], index: 1, kind: input, shape index: {}]
  %s2 = inlined_call_operand.vmem [shape: f32[1,128], index: 2, kind: input, shape index: {}]
  %s3 = inlined_call_operand.hbm [shape: f32[8,128], index: 3, kind: output, shape index: {}]
  %s4 = sld [smem:[#allocation0]]
  $region30: #{tpu_custom_call.1} parent=0
    _
  %s6 = ssub.s32 1, %s4
  %s7 = scalar_select 0, %s6, %s4
  $region1: #{tpu_custom_call.1} parent=0
    #allocation2 [shape = 'u8[4096]{0}', space=vmem, size = 0x1000, scoped, tag = 'input window, operand 0, single buffered']
    #allocation3 [shape = 's32[1]{0}', space=sflag, size = 0x4, scoped, tag = 'scoped memory for tpu_custom_call.1']
    #allocation4 [shape = 's32[1]{0}', space=sflag, size = 0x4, scoped, tag = 'scoped memory for tpu_custom_call.1']
    #allocation5 [shape = 'u8[65536]{0}', space=vmem, size = 0x10000, scoped, tag = 'input window, operand 1, single buffered']
    #allocation6 [shape = 's32[1]{0}', space=sflag, size = 0x4, scoped, tag = 'scoped memory for tpu_custom_call.1']
    #allocation7 [shape = 'u8[4096]{0}', space=vmem, size = 0x1000, scoped, tag = 'output window, operand 0, single buffered']
    %8 = vsyncpa [#allocation3], 0
    %9 = vsyncpa [#allocation6], 0
    %10 = vsyncpa [#allocation4], 0
    // Predicated region
    $region2: #{tpu_custom_call.1} parent=1 // pred_check
      _
    $region3: #{tpu_custom_call.1} parent=1 // pred_check_branch
      %12 = sbr.rel (0) target = $region5
    $region4: #{tpu_custom_call.1} parent=1 // pred_region
      %s14 = ssub.s32 128, 128
      %15 = vsyncadd [#allocation3], %s14
      %s17 = sshll.u32 [#allocation2], 4
      %s18 = int_to_ptr.vmem [resolvable:$true] %s17
      %20 = dma.hbm_to_vmem [thread:$0]  %s0, 128, %s18, [#allocation3]
    $region5: #{tpu_custom_call.1} parent=1 // pred_fallthru
      _
    // Predicated region
    $region6: #{tpu_custom_call.1} parent=1 // pred_check
      _
    $region7: #{tpu_custom_call.1} parent=1 // pred_check_branch
      %22 = sbr.rel (0) target = $region9
    $region8: #{tpu_custom_call.1} parent=1 // pred_region
      %s24 = ssub.s32 2048, 2048
      %25 = vsyncadd [#allocation6], %s24
      %s26 = sshll.u32 [#allocation5], 4
      %s27 = int_to_ptr.vmem [resolvable:$true] %s26
      %32 = dma.hbm_to_vmem [thread:$0]  %s1, 2048, %s27, [#allocation6], 128, 128, 8
    $region9: #{tpu_custom_call.1} parent=1 // pred_fallthru
      _
    // Predicated region
    $region10: #{tpu_custom_call.1} parent=1 // pred_check
      _
    $region11: #{tpu_custom_call.1} parent=1 // pred_check_branch
      %34 = sbr.rel (0) target = $region13
    $region12: #{tpu_custom_call.1} parent=1 // pred_region
      _
    $region13: #{tpu_custom_call.1} parent=1 // pred_fallthru
      _
    // Predicated region
    $region14: #{tpu_custom_call.1} parent=1 // pred_check
      _
    $region15: #{tpu_custom_call.1} parent=1 // pred_check_branch
      %36 = sbr.rel (0) target = $region17
    $region16: #{tpu_custom_call.1} parent=1 // pred_region
      %37 = dma.done [#allocation3], 128
    $region17: #{tpu_custom_call.1} parent=1 // pred_fallthru
      _
    // Predicated region
    $region18: #{tpu_custom_call.1} parent=1 // pred_check
      _
    $region19: #{tpu_custom_call.1} parent=1 // pred_check_branch
      %39 = sbr.rel (0) target = $region21
    $region20: #{tpu_custom_call.1} parent=1 // pred_region
      %40 = dma.done [#allocation6], 2048
    $region21: #{tpu_custom_call.1} parent=1 // pred_fallthru
      _
    %v41 = vld [vmem:[#allocation2] sm:$0xff]
    %v42 = vld [vmem:[%s2] sm:$0x1]
    %v43 = vld [vmem:[#allocation5] sm:$0xff]
    %v44 = vld [vmem:[#allocation5 + $0x8] sm:$0xff]
    %v45 = vld [vmem:[#allocation5 + $0x10] sm:$0xff]
    %v46 = vld [vmem:[#allocation5 + $0x18] sm:$0xff]
    %v47 = vld [vmem:[#allocation5 + $0x20] sm:$0xff]
    %v48 = vld [vmem:[#allocation5 + $0x28] sm:$0xff]
    %v49 = vld [vmem:[#allocation5 + $0x30] sm:$0xff]
    %v50 = vld [vmem:[#allocation5 + $0x38] sm:$0xff]
    %v51 = vld [vmem:[#allocation5 + $0x40] sm:$0xff]
    %v52 = vld [vmem:[#allocation5 + $0x48] sm:$0xff]
    %v53 = vld [vmem:[#allocation5 + $0x50] sm:$0xff]
    %v54 = vld [vmem:[#allocation5 + $0x58] sm:$0xff]
    %v55 = vld [vmem:[#allocation5 + $0x60] sm:$0xff]
    %v56 = vld [vmem:[#allocation5 + $0x68] sm:$0xff]
    %v57 = vld [vmem:[#allocation5 + $0x70] sm:$0xff]
    %v58 = vld [vmem:[#allocation5 + $0x78] sm:$0xff]
    %59 = vmatprep.subr.mxu0 0.0
    %60 = vmatpush1.msra.mxu0 %v43
    %61 = vmatprep.subr.mxu0 0.0
    %62 = vmatpush1.msra.mxu0 %v44
    %63 = vmatprep.subr.mxu0 0.0
    %64 = vmatpush1.msra.mxu0 %v45
    %65 = vmatprep.subr.mxu0 0.0
    %66 = vmatpush1.msra.mxu0 %v46
    %67 = vmatprep.subr.mxu0 0.0
    %68 = vmatpush1.msra.mxu0 %v47
    %69 = vmatprep.subr.mxu0 0.0
    %70 = vmatpush1.msra.mxu0 %v48
    %71 = vmatprep.subr.mxu0 0.0
    %72 = vmatpush1.msra.mxu0 %v49
    %73 = vmatprep.subr.mxu0 0.0
    %74 = vmatpush1.msra.mxu0 %v50
    %75 = vmatprep.subr.mxu0 0.0
    %76 = vmatpush1.msra.mxu0 %v51
    %77 = vmatprep.subr.mxu0 0.0
    %78 = vmatpush1.msra.mxu0 %v52
    %79 = vmatprep.subr.mxu0 0.0
    %80 = vmatpush1.msra.mxu0 %v53
    %81 = vmatprep.subr.mxu0 0.0
    %82 = vmatpush1.msra.mxu0 %v54
    %83 = vmatprep.subr.mxu0 0.0
    %84 = vmatpush1.msra.mxu0 %v55
    %85 = vmatprep.subr.mxu0 0.0
    %86 = vmatpush1.msra.mxu0 %v56
    %87 = vmatprep.subr.mxu0 0.0
    %88 = vmatpush1.msra.mxu0 %v57
    %89 = vmatprep.subr.mxu0 0.0
    %90 = vmatpush1.msra.mxu0 %v58
    %91 = vmatprep.subr.mxu0 0.0
    %92 = vmatpush1.msra.mxu0 0.0
    %93 = vmatprep.subr.mxu0 0.0
    %94 = vmatpush1.msra.mxu0 0.0
    %95 = vmatprep.subr.mxu0 0.0
    %96 = vmatpush1.msra.mxu0 0.0
    %97 = vmatprep.subr.mxu0 0.0
    %98 = vmatpush1.msra.mxu0 0.0
    %99 = vmatprep.subr.mxu0 0.0
    %100 = vmatpush1.msra.mxu0 0.0
    %101 = vmatprep.subr.mxu0 0.0
    %102 = vmatpush1.msra.mxu0 0.0
    %103 = vmatprep.subr.mxu0 0.0
    %104 = vmatpush1.msra.mxu0 0.0
    %105 = vmatprep.subr.mxu0 0.0
    %106 = vmatpush1.msra.mxu0 0.0
    %107 = vmatprep.subr.mxu0 0.0
    %108 = vmatpush1.msra.mxu0 0.0
    %109 = vmatprep.subr.mxu0 0.0
    %110 = vmatpush1.msra.mxu0 0.0
    %111 = vmatprep.subr.mxu0 0.0
    %112 = vmatpush1.msra.mxu0 0.0
    %113 = vmatprep.subr.mxu0 0.0
    %114 = vmatpush1.msra.mxu0 0.0
    %115 = vmatprep.subr.mxu0 0.0
    %116 = vmatpush1.msra.mxu0 0.0
    %117 = vmatprep.subr.mxu0 0.0
    %118 = vmatpush1.msra.mxu0 0.0
    %119 = vmatprep.subr.mxu0 0.0
    %120 = vmatpush1.msra.mxu0 0.0
    %121 = vmatprep.subr.mxu0 0.0
    %122 = vmatpush1.msra.mxu0 0.0
    %123 = vmatprep.mubr.f32.mxu0 0.0
    %124 = vmatmul.mubr.f32.gmra.mrb[0].mxu0 %v41
    %v125 = vpop.f32.mrb[0].mxu0
    %v126 = vadd.f32 0.0, %v125
    %v127 = vpop.f32.mrb[0].mxu0
    %128 = vdwg.mxu0
    %v129 = vmul.f32 %v41, %v41
    %130 = vadd.xlane.f32.xlu0 %v129
    %v131 = vpop.xlane.xlu0 %130
    %v132 = vrsqrt.pop %v131
    %v133 = vmul.f32 %v131, %v132
    %vm134 = vcmp.eq.f32.partialorder %v131, inf
    %v135 = vsel %vm134, %v131, %v133
    %vm136 = vcmp.eq.f32.partialorder %v131, 0.0
    %v137 = vand.u32 %v131, 2147483648
    %v138 = vsel %vm136, %v137, %v135
    %v139 = vmax.f32 %v138, 1e-15
    %v140 = vmul.f32 %v126, %v126
    %141 = vadd.xlane.f32.xlu0 %v140
    %v142 = vpop.xlane.xlu0 %141
    %v143 = vrsqrt.pop %v142
    %v144 = vmul.f32 %v142, %v143
    %vm145 = vcmp.eq.f32.partialorder %v142, inf
    %v146 = vsel %vm145, %v142, %v144
    %vm147 = vcmp.eq.f32.partialorder %v142, 0.0
    %v148 = vand.u32 %v142, 2147483648
    %v149 = vsel %vm147, %v148, %v146
    %v150 = vmax.f32 %v149, 1e-15
    %vm151 = vcmp.le.f32.partialorder %v142, 0.0
    %v152 = vrcp.pop %v139
    %v153 = vmul.f32 %v150, %v152
    %v154 = vmax.f32 %v139, -1.0
    %v155 = vmin.f32 %v154, 1.0
    %v156 = vadd.f32 %v155, 1.0
    %v157 = vlog2.pop %v156
    %v158 = vmul.f32 %v157, 0.6931472
    %v159 = vmul.f32 -0.5, %v155
    %v160 = vadd.f32 %v159, 1.0
    %v161 = vmul.f32 %v160, %v155
    %v162 = vand.u32 2147483647, %v155
    %vm163 = vcmp.lt.f32.partialorder %v162, 0.0004427343
    %v164 = vsel %vm163, %v161, %v158
    %v165 = vsub.f32 0.0, %v155
    %v166 = vadd.f32 %v165, 1.0
    %v167 = vlog2.pop %v166
    %v168 = vmul.f32 %v167, 0.6931472
    %v169 = vmul.f32 -0.5, %v165
    %v170 = vadd.f32 %v169, 1.0
    %v171 = vmul.f32 %v170, %v165
    %v172 = vand.u32 2147483647, %v165
    %vm173 = vcmp.lt.f32.partialorder %v172, 0.0004427343
    %v174 = vsel %vm173, %v171, %v168
    %v175 = vsub.f32 %v164, %v174
    %v176 = vmul.f32 %v175, 0.5
    %v177 = vmul.f32 %v153, %v176
    %v178 = vtanh.pop %v177
    %v179 = vrcp.pop %v150
    %v180 = vmul.f32 %v178, %v179
    %v181 = vmax.f32 %v178, 1e-15
    %vm182 = vcmp.gt.f32.partialorder %v181, 0.996
    %v183 = vrcp.pop %v181
    %v184 = vmul.f32 0.996, %v183
    %v185 = vsel %vm182, %v184, 1.0
    %v186 = vmul.f32 %v180, %v185
    %v187 = vsel %vm151, 0.0, %v186
    %v189 = vlaneseq
    %v190 = vshrl.u32 %v189, 7
    %v191 = vsub.s32 0, %v190
    %v192 = vrot.slane %v42, %v191
    %v194 = vmul.f32 %v126, %v192
    %195 = vadd.xlane.f32.xlu0 %v194
    %v196 = vpop.xlane.xlu0 %195
    %v197 = vmul.f32 %v42, %v42
    %vm198 = vcmask 1040384
    %v199 = vsel %vm198, %v197, 0.0
    %200 = vadd.xlane.f32.xlu0 %v199
    %v201 = vpop.xlane.xlu0 %200
    %v202 = vmul.f32 %v187, %v196
    %v203 = vmul.f32 %v187, %v187
    %v204 = vmul.f32 %v203, %v142
    %v205 = vmul.f32 %v202, 2.0
    %v206 = vadd.f32 %v205, 1.0
    %v207 = vlaneseq
    %v208 = vshrl.u32 %v207, 7
    %v209 = vsub.s32 0, %v208
    %v210 = vrot.slane %v201, %v209
    %v211 = vadd.f32 %v206, %v210
    %v212 = vmul.f32 %v211, %v187
    %v213 = vsub.f32 1.0, %v204
    %v214 = vmul.f32 %v212, %v126
    %v215 = vmul.f32 %v213, %v192
    %v216 = vadd.f32 %v214, %v215
    %v217 = vmul.f32 %v204, %v210
    %v218 = vadd.f32 %v206, %v217
    %v219 = vmax.f32 %v218, 1e-15
    %v220 = vrcp.pop %v219
    %v221 = vmul.f32 %v216, %v216
    %222 = vadd.xlane.f32.xlu0 %v221
    %v223 = vpop.xlane.xlu0 %222
    %v224 = vrsqrt.pop %v223
    %v225 = vmul.f32 %v223, %v224
    %vm226 = vcmp.eq.f32.partialorder %v223, inf
    %v227 = vsel %vm226, %v223, %v225
    %vm228 = vcmp.eq.f32.partialorder %v223, 0.0
    %v229 = vand.u32 %v223, 2147483648
    %v230 = vsel %vm228, %v229, %v227
    %v231 = vmul.f32 %v230, %v220
    %v232 = vmax.f32 %v231, 1e-15
    %vm233 = vcmp.gt.f32.partialorder %v232, 0.996
    %v234 = vrcp.pop %v232
    %v235 = vmul.f32 0.996, %v234
    %v236 = vsel %vm233, %v235, 1.0
    %v237 = vmul.f32 %v220, %v236
    %v238 = vmul.f32 %v216, %v237
    %239 = vst [vmem:[#allocation7] sm:$0xff] %v238
    // Predicated region
    $region22: #{tpu_custom_call.1} parent=1 // pred_check
      _
    $region23: #{tpu_custom_call.1} parent=1 // pred_check_branch
      %241 = sbr.rel (0) target = $region25
    $region24: #{tpu_custom_call.1} parent=1 // pred_region
      %s243 = ssub.s32 128, 128
      %244 = vsyncadd [#allocation4], %s243
      %s246 = sshll.u32 [#allocation7], 4
      %s247 = int_to_ptr.vmem [resolvable:$true] %s246
      %249 = dma.vmem_to_hbm [thread:$0]  %s247, 128, %s3, [#allocation4]
    $region25: #{tpu_custom_call.1} parent=1 // pred_fallthru
      _
    // Predicated region
    $region26: #{tpu_custom_call.1} parent=1 // pred_check
      _
    $region27: #{tpu_custom_call.1} parent=1 // pred_check_branch
      %251 = sbr.rel (0) target = $region29
    $region28: #{tpu_custom_call.1} parent=1 // pred_region
      %252 = dma.done [#allocation4], 128
    $region29: #{tpu_custom_call.1} parent=1 // pred_fallthru
      _
    %253 = vsyncpa [#allocation3], 1
    %254 = vsyncpa [#allocation6], 1
    %255 = vsyncpa [#allocation4], 1

</llo_original>
